<compile_context>
chip_gen: v5e
topology: v5e:2x2
jax: 0.10.0
libtpu: 0.0.40
codegen_flags: <defaults>
</compile_context>

<pallas_src>
import functools

import jax
import jax.numpy as jnp
from jax.experimental import pallas as pl
from jax.experimental.pallas import tpu as pltpu

_LANE_WIDTH = 512                # lane-dense output: large multiple of 128
_DEFAULT_TILE_BYTES = 2 << 20    # v5e / v6e
_V7X_TILE_BYTES = 4 << 20        # v7x: amortize per-step overhead at 3.2 TB/s
_MIN_PALLAS_BYTES = 256 * 1024   # below this, fused XLA elementwise wins


def _round_up(n: int, m: int) -> int:
    return ((n + m - 1) // m) * m


@functools.lru_cache(maxsize=1)
def _tile_bytes() -> int:
    """Per-tile byte target, chosen per TPU generation (best effort)."""
    try:
        info = pltpu.get_tpu_info()
        vmem = getattr(info, "vmem_capacity_bytes", None)
        # v7x has 64 MiB VMEM per TensorCore (v5e/v6e: 128 MiB) but 3.2 TB/s
        # HBM -> larger tiles amortize the fixed per-grid-step overhead.
        if vmem is not None and vmem <= (80 << 20):
            return _V7X_TILE_BYTES
    except Exception:
        pass
    return _DEFAULT_TILE_BYTES


def _swish_kernel(x_ref, o_ref, *, beta: float):
    x = x_ref[...]
    if x.dtype == jnp.bfloat16:
        # Native bf16 VPU/EUP on v6e/v7x; single-EUP sigmoid:
        #   sigmoid(x) = 0.5 * tanh(0.5 * x) + 0.5
        sig = 0.5 * jnp.tanh(0.5 * x) + 0.5
        y = x * sig
    else:
        xc = x.astype(jnp.float32)
        y = xc * jax.nn.sigmoid(xc)
    if beta != 1.0:
        y = beta * y
    o_ref[...] = y.astype(o_ref.dtype)


@functools.partial(jax.jit, static_argnames=("beta", "min_pallas_bytes"))
def swish(x: jax.Array, beta: float = 1.0,
          min_pallas_bytes: int = _MIN_PALLAS_BYTES) -> jax.Array:
    """Elementwise Swish, matching the PyTorch module's semantics exactly."""
    # Only beta > 1 scales the output (E-Swish); beta <= 1 -> standard Swish.
    eff_beta = float(beta) if float(beta) > 1.0 else 1.0

    orig_shape = x.shape
    orig_dtype = x.dtype
    n = int(x.size)
    if n == 0:
        return x

    itemsize = jnp.dtype(orig_dtype).itemsize
    total_bytes = n * itemsize

    # Tiny inputs: a fused XLA elementwise beats the pallas_call launch cost.
    if total_bytes < min_pallas_bytes:
        y = x * jax.nn.sigmoid(x)
        if eff_beta != 1.0:
            y = (eff_beta * y).astype(orig_dtype)
        return y

    cols = _LANE_WIDTH
    rows = pl.cdiv(n, cols)
    needs_pad = (rows * cols != n)

    flat = x.reshape(-1)
    if needs_pad:
        # Pads < 512 elements; 0 * sigmoid(0) = 0 is harmless and discarded.
        flat = jnp.pad(flat, (0, rows * cols - n))
    x2 = flat.reshape(rows, cols)

    # Rows per tile: multiple of 8 sublanes, ~_tile_bytes() per tile.
    # 1 input + 1 output, double-buffered -> well under every generation's
    # scoped-VMEM default (v5e 16 MiB, v6e/v7x 32 MiB).
    tr = max(8, (_tile_bytes() // (cols * itemsize)) // 8 * 8)
    if rows <= tr:
        tr = rows            # single full block (block dims == array dims)
    steps = pl.cdiv(rows, tr)

    # Keep the grid balanced across v7x's two TensorCores when it matters.
    if total_bytes >= (1 << 20):
        if steps == 1 and rows >= 16:
            target = 2
        elif 1 < steps < 8 and steps % 2 == 1:
            target = steps + 1
        else:
            target = steps
        if target != steps:
            tr = max(8, _round_up(pl.cdiv(rows, target), 8))
            steps = pl.cdiv(rows, tr)

    out = pl.pallas_call(
        functools.partial(_swish_kernel, beta=eff_beta),
        out_shape=jax.ShapeDtypeStruct((rows, cols), orig_dtype),
        grid_spec=pltpu.PrefetchScalarGridSpec(
            num_scalar_prefetch=0,
            grid=(steps,),
            in_specs=[pl.BlockSpec((tr, cols), lambda i: (i, 0))],
            out_specs=pl.BlockSpec((tr, cols), lambda i: (i, 0)),
        ),
        compiler_params=pltpu.CompilerParams(
            dimension_semantics=("parallel",),
        ),
        # Alias only when x2 is a fresh padded intermediate; aliasing the
        # caller's non-donated buffer would force a defensive copy.
        input_output_aliases=({0: 0} if needs_pad else {}),
    )(x2)

    if needs_pad:
        return out.reshape(-1)[:n].reshape(orig_shape)
    return out.reshape(orig_shape)


if __name__ == "__main__":
    key = jax.random.PRNGKey(0)

    # Small NCHW-style input consistent with typical usage: batch=2, C=4, 16x16.
    x = jax.random.normal(key, (2, 4, 16, 16), dtype=jnp.float32)
    ref = x * jax.nn.sigmoid(x)

    # Force the Pallas path for this small input so the kernel is exercised.
    y = jax.block_until_ready(swish(x, beta=1.0, min_pallas_bytes=0))
    assert y.shape == x.shape and y.dtype == x.dtype
    assert jnp.allclose(y, ref, atol=1e-6, rtol=1e-6)

    # E-Swish branch (beta > 1).
    y2 = jax.block_until_ready(swish(x, beta=1.5, min_pallas_bytes=0))
    assert jnp.allclose(y2, 1.5 * ref, atol=1e-6, rtol=1e-6)

    # beta < 1 falls back to standard Swish, exactly like the PyTorch module.
    y3 = jax.block_until_ready(swish(x, beta=0.5, min_pallas_bytes=0))
    assert jnp.allclose(y3, ref, atol=1e-6, rtol=1e-6)

    # Default threshold: tiny input takes the fused-XLA fast path.
    y4 = jax.block_until_ready(swish(x))
    assert jnp.allclose(y4, ref, atol=1e-6, rtol=1e-6)

    # bf16 no-pad Pallas path (size % 512 == 0), single-EUP sigmoid in-kernel.
    xb = jax.random.normal(key, (4, 8, 64, 128), dtype=jnp.bfloat16)
    yb = jax.block_until_ready(swish(xb, min_pallas_bytes=0))
    xb32 = xb.astype(jnp.float32)
    refb = xb32 * jax.nn.sigmoid(xb32)
    assert yb.dtype == jnp.bfloat16 and yb.shape == xb.shape
    assert jnp.allclose(yb.astype(jnp.float32), refb, atol=2e-2, rtol=2e-2)

    print("KERNEL_OK")
</pallas_src>

<mosaic_0001>
module attributes {stable_mosaic.version = 11 : i64} {
  func.func @_swish_kernel(%arg0: i32, %arg1: memref<4x512xf32, #tpu.memory_space<vmem>>, %arg2: memref<4x512xf32, #tpu.memory_space<vmem>>) attributes {dimension_semantics = [#tpu.dimension_semantics<parallel>], iteration_bounds = array<i64: 1>, scalar_prefetch = 0 : i64, scratch_operands = 0 : i64, tpu.core_type = #tpu.core_type<tc>, window_params = [{transform_indices = @transform_0, window_bounds = array<i64: 4, 512>}, {transform_indices = @transform_1, window_bounds = array<i64: 4, 512>}]} {
    %c0 = arith.constant 0 : index
    %c0_0 = arith.constant 0 : index
    %0 = vector.load %arg1[%c0, %c0_0] : memref<4x512xf32, #tpu.memory_space<vmem>>, vector<4x512xf32>
    %1 = arith.negf %0 : vector<4x512xf32>
    %2 = math.exp %1 : vector<4x512xf32>
    %cst = arith.constant 1.000000e+00 : f32
    %3 = vector.broadcast %cst : f32 to vector<4x512xf32>
    %4 = arith.addf %3, %2 : vector<4x512xf32>
    %5 = arith.divf %3, %4 : vector<4x512xf32>
    %6 = arith.mulf %0, %5 : vector<4x512xf32>
    %c0_1 = arith.constant 0 : index
    %c0_2 = arith.constant 0 : index
    %7 = vector.load %arg2[%c0_1, %c0_2] : memref<4x512xf32, #tpu.memory_space<vmem>>, vector<4x512xf32>
    tpu.vector_store %arg2[%c0_1, %c0_2], %6 {strides = array<i32>} : memref<4x512xf32, #tpu.memory_space<vmem>>, vector<4x512xf32>,
    return
  }
  func.func @transform_0(%arg0: i32) -> (i32, i32) {
    %c0_i32 = arith.constant 0 : i32
    %c0_i32_0 = arith.constant 0 : i32
    return %arg0, %c0_i32 : i32, i32
  }
  func.func @transform_1(%arg0: i32) -> (i32, i32) {
    %c0_i32 = arith.constant 0 : i32
    %c0_i32_0 = arith.constant 0 : i32
    return %arg0, %c0_i32 : i32, i32
  }
}

</mosaic_0001>

<llo_original>
// kernel: swish.1
$region0: #{swish.1}
  #allocation0 [shape = 'u32[]', space=smem, size = 0x4, offset = 0x4, fixed_abs, tag = 'smem constant byte address 0x4 - core index']
  #allocation1 [shape = 'u32[72,128]{1,0:T(1,128)}', space=vmem, size = 0x9000, scoped, tag = 'internal scratch']
  %s0 = inlined_call_operand.vmem [shape: f32[4,512], index: 0, kind: input, shape index: {}]
  %s1 = inlined_call_operand.vmem [shape: f32[4,512], index: 1, kind: output, shape index: {}]
  %s2 = sld [smem:[#allocation0]]
  $region14: #{swish.1} parent=0
    _
  %s4 = ssub.s32 1, %s2
  %s5 = scalar_select 0, %s4, %s2
  // Predicated region
  $region2: #{swish.1} parent=0 // pred_check
    _
  $region3: #{swish.1} parent=0 // pred_check_branch
    %7 = sbr.rel (0) target = $region5
  $region4: #{swish.1} parent=0 // pred_region
    _
  $region5: #{swish.1} parent=0 // pred_fallthru
    _
  %v8 = vld [vmem:[%s0] sm:$0xff]
  %v9 = vld [vmem:[%s0 + $0x8] sm:$0xff]
  %v10 = vxor.u32 %v8, 2147483648
  %v11 = vxor.u32 %v9, 2147483648
  %v12 = vmul.f32 %v10, 1.442695
  %v13 = vpow.pop %v12
  %v14 = vmul.f32 %v11, 1.442695
  %v15 = vpow.pop %v14
  %v16 = vadd.f32 %v13, 1.0
  %v17 = vadd.f32 %v15, 1.0
  %v18 = vrcp.pop %v16
  %v19 = vmul.f32 %v16, %v18
  %v20 = vsub.f32 1.0, %v19
  %v21 = vmul.f32 %v18, %v20
  %v22 = vadd.f32 %v18, %v21
  %vm23 = vweird.f32 %v16
  %vm24 = vweird.f32 %v18
  %vm25 = vmor %vm23, %vm24
  %v26 = vsel %vm25, %v18, %v22
  %v27 = vand.u32 2147483647, %v16
  %vm28 = vcmp.eq.f32.partialorder %v27, 8.507059e+37
  %v29 = vand.u32 %v16, 2147483648
  %v30 = vor.u32 1.1754944e-38, %v29
  %v31 = vsel %vm28, %v30, %v26
  %v32 = vmul.f32 1.0, %v31
  %v33 = vrcp.pop %v17
  %v34 = vmul.f32 %v17, %v33
  %v35 = vsub.f32 1.0, %v34
  %v36 = vmul.f32 %v33, %v35
  %v37 = vadd.f32 %v33, %v36
  %vm38 = vweird.f32 %v17
  %vm39 = vweird.f32 %v33
  %vm40 = vmor %vm38, %vm39
  %v41 = vsel %vm40, %v33, %v37
  %v42 = vand.u32 2147483647, %v17
  %vm43 = vcmp.eq.f32.partialorder %v42, 8.507059e+37
  %v44 = vand.u32 %v17, 2147483648
  %v45 = vor.u32 1.1754944e-38, %v44
  %v46 = vsel %vm43, %v45, %v41
  %v47 = vmul.f32 1.0, %v46
  %v48 = vmul.f32 %v8, %v32
  %v49 = vmul.f32 %v9, %v47
  %50 = vst [vmem:[%s1] sm:$0xff] %v48
  %51 = vst [vmem:[%s1 + $0x8] sm:$0xff] %v49
  // Predicated region
  $region6: #{swish.1} parent=0 // pred_check
    _
  $region7: #{swish.1} parent=0 // pred_check_branch
    %53 = sbr.rel (0) target = $region9
  $region8: #{swish.1} parent=0 // pred_region
    _
  $region9: #{swish.1} parent=0 // pred_fallthru
    _
  // Predicated region
  $region10: #{swish.1} parent=0 // pred_check
    _
  $region11: #{swish.1} parent=0 // pred_check_branch
    %55 = sbr.rel (0) target = $region13
  $region12: #{swish.1} parent=0 // pred_region
    _
  $region13: #{swish.1} parent=0 // pred_fallthru
    _

</llo_original>
